<compile_context>
chip_gen: v7x
topology: tpu7x:2x2x1
jax: 0.10.0
libtpu: 0.0.40
codegen_flags: <defaults>
</compile_context>

<pallas_src>
import functools

import jax
import jax.numpy as jnp
from jax import lax
from jax.experimental import pallas as pl
from jax.experimental.pallas import tpu as pltpu

FIELD_ORDER = ("gender", "age", "occupation", "area")
_AREA_CHUNK_MAX = 512  # K-chunk size for the area (zipcode) table scan.


def _round_up(x, m):
    return ((x + m - 1) // m) * m


def pack_user_params(params):
    """Pack the 4 tables into one block-diagonal (SMALL_PAD + AREA_PAD, 4*D) table.

    Rows [0, SMALL_PAD)      : gender / age / occupation stacked (disjoint).
    Rows [SMALL_PAD, ...)    : area (zipcode) table, padded to a chunk multiple.
    Columns [f*D, (f+1)*D)   : field f's embedding (block-diagonal).

    Returns (table, offsets, meta).  Call once at init time, not per step.
    """
    D = params["gender"].shape[1]
    vg = params["gender"].shape[0]
    va = params["age"].shape[0]
    vo = params["occupation"].shape[0]
    vz = params["area"].shape[0]

    small_total = vg + va + vo
    small_pad = _round_up(small_total, 128)

    area_pad_128 = _round_up(vz, 128)
    if area_pad_128 >= _AREA_CHUNK_MAX:
        chunk = _AREA_CHUNK_MAX
        area_pad = _round_up(vz, chunk)
    else:
        chunk = area_pad_128
        area_pad = area_pad_128

    v_pad = small_pad + area_pad
    n_fields = len(FIELD_ORDER)

    table = jnp.zeros((v_pad, n_fields * D), jnp.float32)
    offsets = []
    off = 0
    for f, name in enumerate(("gender", "age", "occupation")):
        v = params[name].shape[0]
        table = table.at[off:off + v, f * D:(f + 1) * D].set(
            params[name].astype(jnp.float32))
        offsets.append(off)
        off += v
    table = table.at[small_pad:small_pad + vz, 3 * D:4 * D].set(
        params["area"].astype(jnp.float32))
    offsets.append(small_pad)

    meta = {"small_pad": small_pad, "area_pad": area_pad, "chunk": chunk}
    return table, jnp.asarray(offsets, jnp.int32), meta


def user_kernel(idx_ref, tbl_ref, out_ref, *, small_pad, area_pad, chunk):
    # idx_ref: (TB, 4) int32, per-field row offsets already applied.
    # tbl_ref: (small_pad + area_pad, 4*D) f32 block-diagonal packed table.
    # out_ref: (TB, 4*D) f32.
    idx = idx_ref[...]                                         # (TB, 4)
    tb = idx.shape[0]

    # --- small fields (gender / age / occupation): rows [0, small_pad) ------
    # One hoisted 2D iota, three lane-broadcast compares OR'd, single cast.
    iota_s = lax.broadcasted_iota(jnp.int32, (tb, small_pad), 1)
    hit_s = ((idx[:, 0:1] == iota_s)
             | (idx[:, 1:2] == iota_s)
             | (idx[:, 2:3] == iota_s)).astype(jnp.float32)    # (TB, small_pad)
    acc = jnp.dot(hit_s, tbl_ref[0:small_pad, :],
                  preferred_element_type=jnp.float32)          # (TB, 4*D)

    # --- area field: K-chunked one-hot @ table slice ------------------------
    area = idx[:, 3:4]                                         # (TB, 1)
    iota_c = lax.broadcasted_iota(jnp.int32, (tb, chunk), 1)   # hoisted
    n_chunks = area_pad // chunk
    for c in range(n_chunks):                                  # static unroll
        k0 = small_pad + c * chunk                             # Python int
        hit_c = ((area - k0) == iota_c).astype(jnp.float32)    # (TB, chunk)
        acc = acc + jnp.dot(hit_c, tbl_ref[k0:k0 + chunk, :],
                            preferred_element_type=jnp.float32)

    # Single full-width unmasked store (4*D is a multiple of 128).
    out_ref[...] = acc


def _pick_tb(B):
    """Batch tile: multiple of 8 dividing B, <=512, >=2 grid steps when B>=16
    so both v7x TensorCores get work; otherwise one full-array block."""
    if B % 8 != 0:
        return B
    for cand in (512, 256, 128, 64, 32, 16, 8):
        if cand <= B // 2 and B % cand == 0:
            return cand
    return B


def user_forward(gender_idx, age_idx, occupation_idx, area_idx,
                 table, offsets, meta, *, tb=None):
    B = gender_idx.shape[0]
    v_pad, fd = table.shape
    n_fields = offsets.shape[0]

    # Cheap wrapper-side prep (hoistable into data-prep time): stack the four
    # index vectors and pre-add each field's packed-table row offset.
    idx = jnp.stack([gender_idx, age_idx, occupation_idx, area_idx],
                    axis=1).astype(jnp.int32) + offsets[None, :]

    if tb is None:
        tb = _pick_tb(B)
    assert B % tb == 0, (B, tb)
    grid = (B // tb,)

    kernel = functools.partial(user_kernel,
                               small_pad=meta["small_pad"],
                               area_pad=meta["area_pad"],
                               chunk=meta["chunk"])

    return pl.pallas_call(
        kernel,
        out_shape=jax.ShapeDtypeStruct((B, fd), jnp.float32),
        grid_spec=pltpu.PrefetchScalarGridSpec(
            num_scalar_prefetch=0,
            grid=grid,
            in_specs=[
                pl.BlockSpec((tb, n_fields), lambda i: (i, 0)),
                # Constant index_map: packed table stays VMEM-resident.
                pl.BlockSpec((v_pad, fd), lambda i: (0, 0)),
            ],
            out_specs=pl.BlockSpec((tb, fd), lambda i: (i, 0)),
        ),
        compiler_params=pltpu.CompilerParams(
            dimension_semantics=("parallel",)),
    )(idx, table)


def user_reference(gender_idx, age_idx, occupation_idx, area_idx, params):
    # Pure-JAX mirror of the PyTorch forward (remove_gender=False path).
    g = params["gender"][gender_idx]
    a = params["age"][age_idx]
    o = params["occupation"][occupation_idx]
    z = params["area"][area_idx]
    return jnp.concatenate([g, a, o, z], axis=1)


if __name__ == "__main__":
    # Small synthetic "config" (real ML1M: gender=2, age=7, occupation=21,
    # zipcode ~3439; zipcode kept small here for the test).
    num_gender, num_age, num_occupation, num_zipcode = 2, 7, 21, 64
    embedding_dim = 32

    key = jax.random.PRNGKey(0)
    k_g, k_a, k_o, k_z, k_idx = jax.random.split(key, 5)

    params = {
        "gender": jax.random.normal(k_g, (num_gender, embedding_dim), jnp.float32),
        "age": jax.random.normal(k_a, (num_age, embedding_dim), jnp.float32),
        "occupation": jax.random.normal(k_o, (num_occupation, embedding_dim), jnp.float32),
        "area": jax.random.normal(k_z, (num_zipcode, embedding_dim), jnp.float32),
    }

    # One-time parameter packing (init-time, outside the hot path).
    table, offsets, meta = pack_user_params(params)

    ok = True
    for B in (8, 32):  # B=32 exercises the multi-step ("parallel") grid path.
        k_idx, k_gi, k_ai, k_oi, k_zi = jax.random.split(k_idx, 5)
        gender_idx = jax.random.randint(k_gi, (B,), 0, num_gender, jnp.int32)
        age_idx = jax.random.randint(k_ai, (B,), 0, num_age, jnp.int32)
        occupation_idx = jax.random.randint(k_oi, (B,), 0, num_occupation, jnp.int32)
        area_idx = jax.random.randint(k_zi, (B,), 0, num_zipcode, jnp.int32)

        out = user_forward(gender_idx, age_idx, occupation_idx, area_idx,
                           table, offsets, meta)
        out = jax.block_until_ready(out)

        ref = user_reference(gender_idx, age_idx, occupation_idx, area_idx, params)
        assert out.shape == (B, 4 * embedding_dim), out.shape
        err = float(jnp.max(jnp.abs(out - ref)))
        ok = ok and bool(jnp.allclose(out, ref, rtol=1e-5, atol=1e-5))
        assert ok, err

    print("KERNEL_OK")
</pallas_src>

<mosaic_0001>
module attributes {stable_mosaic.version = 11 : i64} {
  func.func @user_kernel(%arg0: i32, %arg1: memref<8x4xi32, #tpu.memory_space<vmem>>, %arg2: memref<256x128xf32, #tpu.memory_space<vmem>>, %arg3: memref<8x128xf32, #tpu.memory_space<vmem>>) attributes {dimension_semantics = [#tpu.dimension_semantics<parallel>], iteration_bounds = array<i64: 1>, scalar_prefetch = 0 : i64, scratch_operands = 0 : i64, tpu.core_type = #tpu.core_type<tc>, window_params = [{transform_indices = @transform_0, window_bounds = array<i64: 8, 4>}, {pipeline_mode = #tpu.pipeline_mode<synchronous>, transform_indices = @transform_1, window_bounds = array<i64: 256, 128>}, {transform_indices = @transform_2, window_bounds = array<i64: 8, 128>}]} {
    %c0 = arith.constant 0 : index
    %c0_0 = arith.constant 0 : index
    %0 = vector.load %arg1[%c0, %c0_0] : memref<8x4xi32, #tpu.memory_space<vmem>>, vector<8x4xi32>
    %1 = tpu.iota {dimensions = array<i32: 1>} : vector<8x128xi32>
    %2 = vector.extract_strided_slice %0 {offsets = [0, 0], sizes = [8, 1], strides = [1, 1]} : vector<8x4xi32> to vector<8x1xi32>
    %3 = vector.broadcast %2 : vector<8x1xi32> to vector<8x128xi32>
    %4 = arith.cmpi eq, %3, %1 : vector<8x128xi32>
    %5 = vector.extract_strided_slice %0 {offsets = [0, 1], sizes = [8, 1], strides = [1, 1]} : vector<8x4xi32> to vector<8x1xi32>
    %6 = vector.broadcast %5 : vector<8x1xi32> to vector<8x128xi32>
    %7 = arith.cmpi eq, %6, %1 : vector<8x128xi32>
    %8 = arith.ori %4, %7 : vector<8x128xi1>
    %9 = vector.extract_strided_slice %0 {offsets = [0, 2], sizes = [8, 1], strides = [1, 1]} : vector<8x4xi32> to vector<8x1xi32>
    %10 = vector.broadcast %9 : vector<8x1xi32> to vector<8x128xi32>
    %11 = arith.cmpi eq, %10, %1 : vector<8x128xi32>
    %12 = arith.ori %8, %11 : vector<8x128xi1>
    %13 = arith.extui %12 : vector<8x128xi1> to vector<8x128xi32>
    %14 = arith.sitofp %13 : vector<8x128xi32> to vector<8x128xf32>
    %c0_1 = arith.constant 0 : index
    %c0_2 = arith.constant 0 : index
    %15 = vector.load %arg2[%c0_1, %c0_2] : memref<256x128xf32, #tpu.memory_space<vmem>>, vector<128x128xf32>
    %cst = arith.constant dense<0.000000e+00> : vector<8x128xf32>
    %16 = tpu.matmul %14, %15, %cst {dimension_numbers = #tpu.dot_dimension_numbers<[1], [0], [0], [1], [0, 0, 1, 1], [], []>} : vector<8x128xf32>, vector<128x128xf32>, vector<8x128xf32> -> vector<8x128xf32>
    %17 = vector.extract_strided_slice %0 {offsets = [0, 3], sizes = [8, 1], strides = [1, 1]} : vector<8x4xi32> to vector<8x1xi32>
    %18 = tpu.iota {dimensions = array<i32: 1>} : vector<8x128xi32>
    %c128_i32 = arith.constant 128 : i32
    %19 = vector.broadcast %c128_i32 : i32 to vector<8x1xi32>
    %20 = arith.subi %17, %19 : vector<8x1xi32>
    %21 = vector.broadcast %20 : vector<8x1xi32> to vector<8x128xi32>
    %22 = arith.cmpi eq, %21, %18 : vector<8x128xi32>
    %23 = arith.extui %22 : vector<8x128xi1> to vector<8x128xi32>
    %24 = arith.sitofp %23 : vector<8x128xi32> to vector<8x128xf32>
    %c128 = arith.constant 128 : index
    %c0_3 = arith.constant 0 : index
    %25 = vector.load %arg2[%c128, %c0_3] : memref<256x128xf32, #tpu.memory_space<vmem>>, vector<128x128xf32>
    %cst_4 = arith.constant dense<0.000000e+00> : vector<8x128xf32>
    %26 = tpu.matmul %24, %25, %cst_4 {dimension_numbers = #tpu.dot_dimension_numbers<[1], [0], [0], [1], [0, 0, 1, 1], [], []>} : vector<8x128xf32>, vector<128x128xf32>, vector<8x128xf32> -> vector<8x128xf32>
    %27 = arith.addf %16, %26 : vector<8x128xf32>
    %c0_5 = arith.constant 0 : index
    %c0_6 = arith.constant 0 : index
    %28 = vector.load %arg3[%c0_5, %c0_6] : memref<8x128xf32, #tpu.memory_space<vmem>>, vector<8x128xf32>
    tpu.vector_store %arg3[%c0_5, %c0_6], %27 {strides = array<i32>} : memref<8x128xf32, #tpu.memory_space<vmem>>, vector<8x128xf32>,
    return
  }
  func.func @transform_0(%arg0: i32) -> (i32, i32) {
    %c0_i32 = arith.constant 0 : i32
    %c0_i32_0 = arith.constant 0 : i32
    return %arg0, %c0_i32 : i32, i32
  }
  func.func @transform_1(%arg0: i32) -> (i32, i32) {
    %c0_i32 = arith.constant 0 : i32
    %c0_i32_0 = arith.constant 0 : i32
    %c0_i32_1 = arith.constant 0 : i32
    return %c0_i32, %c0_i32_0 : i32, i32
  }
  func.func @transform_2(%arg0: i32) -> (i32, i32) {
    %c0_i32 = arith.constant 0 : i32
    %c0_i32_0 = arith.constant 0 : i32
    return %arg0, %c0_i32 : i32, i32
  }
}

</mosaic_0001>

<llo_original>
// kernel: tpu_custom_call.1
$region0: #{tpu_custom_call.1}
  #allocation0 [shape = 'u32[]', space=smem, size = 0x4, offset = 0x4, fixed_abs, tag = 'smem constant byte address 0x4 - core index']
  #allocation1 [shape = 'u32[144,128]{1,0:T(1,128)}', space=vmem, size = 0x12000, scoped, tag = 'internal scratch']
  %s0 = inlined_call_operand.vmem [shape: s32[8,4], index: 0, kind: input, shape index: {}]
  %s1 = inlined_call_operand.hbm [shape: f32[256,128], index: 1, kind: input, shape index: {}]
  %s2 = inlined_call_operand.hbm [shape: f32[8,128], index: 2, kind: output, shape index: {}]
  %s3 = sld [smem:[#allocation0]]
  $region22: #{tpu_custom_call.1} parent=0
    _
  %s5 = ssub.s32 1, %s3
  %s6 = scalar_select 0, %s5, %s3
  $region1: #{tpu_custom_call.1} parent=0
    #allocation2 [shape = 'u8[131072]{0}', space=vmem, size = 0x20000, scoped, tag = 'input window, operand 1, single buffered']
    #allocation3 [shape = 's32[1]{0}', space=sflag, size = 0x4, scoped, tag = 'scoped memory for tpu_custom_call.1']
    #allocation4 [shape = 's32[1]{0}', space=sflag, size = 0x4, scoped, tag = 'scoped memory for tpu_custom_call.1']
    #allocation5 [shape = 'u8[4096]{0}', space=vmem, size = 0x1000, scoped, tag = 'output window, operand 0, single buffered']
    %7 = vsyncpa [#allocation3], 0
    %8 = vsyncpa [#allocation4], 0
    // Predicated region
    $region2: #{tpu_custom_call.1} parent=1 // pred_check
      _
    $region3: #{tpu_custom_call.1} parent=1 // pred_check_branch
      %10 = sbr.rel (0) target = $region5
    $region4: #{tpu_custom_call.1} parent=1 // pred_region
      _
    $region5: #{tpu_custom_call.1} parent=1 // pred_fallthru
      _
    // Predicated region
    $region6: #{tpu_custom_call.1} parent=1 // pred_check
      _
    $region7: #{tpu_custom_call.1} parent=1 // pred_check_branch
      %12 = sbr.rel (0) target = $region9
    $region8: #{tpu_custom_call.1} parent=1 // pred_region
      %s14 = ssub.s32 4096, 4096
      %15 = vsyncadd [#allocation3], %s14
      %s16 = sshll.u32 [#allocation2], 4
      %s17 = int_to_ptr.vmem [resolvable:$true] %s16
      %22 = dma.hbm_to_vmem [thread:$0]  %s1, 4096, %s17, [#allocation3], 128, 128, 8
    $region9: #{tpu_custom_call.1} parent=1 // pred_fallthru
      _
    // Predicated region
    $region10: #{tpu_custom_call.1} parent=1 // pred_check
      _
    $region11: #{tpu_custom_call.1} parent=1 // pred_check_branch
      %24 = sbr.rel (0) target = $region13
    $region12: #{tpu_custom_call.1} parent=1 // pred_region
      %25 = dma.done [#allocation3], 4096
    $region13: #{tpu_custom_call.1} parent=1 // pred_fallthru
      _
    %v26 = vld [vmem:[%s0] sm:$0xff]
    %v27 = vlaneseq
    %v28 = vand.u32 %v27, 127
    %29 = vset.pattern.permute.xlu0 0
    %30 = vperm.xlu0 %29, %v26
    %v31 = vpop.permute.xlu0 %30
    %vm32 = vcmp.eq.s32.totalorder %v31, %v28
    %33 = vset.pattern.permute.xlu0 1
    %34 = vperm.xlu0 %33, %v26
    %v35 = vpop.permute.xlu0 %34
    %vm36 = vcmp.eq.s32.totalorder %v35, %v28
    %vm37 = vmor %vm32, %vm36
    %38 = vset.pattern.permute.xlu0 2
    %39 = vperm.xlu0 %38, %v26
    %v40 = vpop.permute.xlu0 %39
    %vm41 = vcmp.eq.s32.totalorder %v40, %v28
    %vm42 = vmor %vm37, %vm41
    %v43 = vsel %vm42, 1, 0
    %v44 = vcvt.s32.f32 %v43
    %v45 = vld [vmem:[#allocation2] sm:$0xff]
    %v46 = vld [vmem:[#allocation2 + $0x8] sm:$0xff]
    %v47 = vld [vmem:[#allocation2 + $0x10] sm:$0xff]
    %v48 = vld [vmem:[#allocation2 + $0x18] sm:$0xff]
    %v49 = vld [vmem:[#allocation2 + $0x20] sm:$0xff]
    %v50 = vld [vmem:[#allocation2 + $0x28] sm:$0xff]
    %v51 = vld [vmem:[#allocation2 + $0x30] sm:$0xff]
    %v52 = vld [vmem:[#allocation2 + $0x38] sm:$0xff]
    %v53 = vld [vmem:[#allocation2 + $0x40] sm:$0xff]
    %v54 = vld [vmem:[#allocation2 + $0x48] sm:$0xff]
    %v55 = vld [vmem:[#allocation2 + $0x50] sm:$0xff]
    %v56 = vld [vmem:[#allocation2 + $0x58] sm:$0xff]
    %v57 = vld [vmem:[#allocation2 + $0x60] sm:$0xff]
    %v58 = vld [vmem:[#allocation2 + $0x68] sm:$0xff]
    %v59 = vld [vmem:[#allocation2 + $0x70] sm:$0xff]
    %v60 = vld [vmem:[#allocation2 + $0x78] sm:$0xff]
    %v61 = vsub.s32 %v26, 128
    %62 = vset.pattern.permute.xlu0 3
    %63 = vperm.xlu0 %62, %v61
    %v64 = vpop.permute.xlu0 %63
    %vm65 = vcmp.eq.s32.totalorder %v64, %v28
    %v66 = vsel %vm65, 1, 0
    %v67 = vcvt.s32.f32 %v66
    %v68 = vld [vmem:[#allocation2 + $0x80] sm:$0xff]
    %v69 = vld [vmem:[#allocation2 + $0x88] sm:$0xff]
    %v70 = vld [vmem:[#allocation2 + $0x90] sm:$0xff]
    %v71 = vld [vmem:[#allocation2 + $0x98] sm:$0xff]
    %v72 = vld [vmem:[#allocation2 + $0xa0] sm:$0xff]
    %v73 = vld [vmem:[#allocation2 + $0xa8] sm:$0xff]
    %v74 = vld [vmem:[#allocation2 + $0xb0] sm:$0xff]
    %v75 = vld [vmem:[#allocation2 + $0xb8] sm:$0xff]
    %v76 = vld [vmem:[#allocation2 + $0xc0] sm:$0xff]
    %v77 = vld [vmem:[#allocation2 + $0xc8] sm:$0xff]
    %v78 = vld [vmem:[#allocation2 + $0xd0] sm:$0xff]
    %v79 = vld [vmem:[#allocation2 + $0xd8] sm:$0xff]
    %v80 = vld [vmem:[#allocation2 + $0xe0] sm:$0xff]
    %v81 = vld [vmem:[#allocation2 + $0xe8] sm:$0xff]
    %v82 = vld [vmem:[#allocation2 + $0xf0] sm:$0xff]
    %v83 = vld [vmem:[#allocation2 + $0xf8] sm:$0xff]
    %84 = vmatprep.subr.mxu0 0.0
    %85 = vmatpush1.msra.mxu0 %v68
    %86 = vmatprep.subr.mxu0 0.0
    %87 = vmatpush1.msra.mxu0 %v69
    %88 = vmatprep.subr.mxu0 0.0
    %89 = vmatpush1.msra.mxu0 %v70
    %90 = vmatprep.subr.mxu0 0.0
    %91 = vmatpush1.msra.mxu0 %v71
    %92 = vmatprep.subr.mxu0 0.0
    %93 = vmatpush1.msra.mxu0 %v72
    %94 = vmatprep.subr.mxu0 0.0
    %95 = vmatpush1.msra.mxu0 %v73
    %96 = vmatprep.subr.mxu0 0.0
    %97 = vmatpush1.msra.mxu0 %v74
    %98 = vmatprep.subr.mxu0 0.0
    %99 = vmatpush1.msra.mxu0 %v75
    %100 = vmatprep.subr.mxu0 0.0
    %101 = vmatpush1.msra.mxu0 %v76
    %102 = vmatprep.subr.mxu0 0.0
    %103 = vmatpush1.msra.mxu0 %v77
    %104 = vmatprep.subr.mxu0 0.0
    %105 = vmatpush1.msra.mxu0 %v78
    %106 = vmatprep.subr.mxu0 0.0
    %107 = vmatpush1.msra.mxu0 %v79
    %108 = vmatprep.subr.mxu0 0.0
    %109 = vmatpush1.msra.mxu0 %v80
    %110 = vmatprep.subr.mxu0 0.0
    %111 = vmatpush1.msra.mxu0 %v81
    %112 = vmatprep.subr.mxu0 0.0
    %113 = vmatpush1.msra.mxu0 %v82
    %114 = vmatprep.subr.mxu0 0.0
    %115 = vmatpush1.msra.mxu0 %v83
    %116 = vmatprep.subr.mxu0 0.0
    %117 = vmatpush1.msra.mxu0 0.0
    %118 = vmatprep.subr.mxu0 0.0
    %119 = vmatpush1.msra.mxu0 0.0
    %120 = vmatprep.subr.mxu0 0.0
    %121 = vmatpush1.msra.mxu0 0.0
    %122 = vmatprep.subr.mxu0 0.0
    %123 = vmatpush1.msra.mxu0 0.0
    %124 = vmatprep.subr.mxu0 0.0
    %125 = vmatpush1.msra.mxu0 0.0
    %126 = vmatprep.subr.mxu0 0.0
    %127 = vmatpush1.msra.mxu0 0.0
    %128 = vmatprep.subr.mxu0 0.0
    %129 = vmatpush1.msra.mxu0 0.0
    %130 = vmatprep.subr.mxu0 0.0
    %131 = vmatpush1.msra.mxu0 0.0
    %132 = vmatprep.subr.mxu0 0.0
    %133 = vmatpush1.msra.mxu0 0.0
    %134 = vmatprep.subr.mxu0 0.0
    %135 = vmatpush1.msra.mxu0 0.0
    %136 = vmatprep.subr.mxu0 0.0
    %137 = vmatpush1.msra.mxu0 0.0
    %138 = vmatprep.subr.mxu0 0.0
    %139 = vmatpush1.msra.mxu0 0.0
    %140 = vmatprep.subr.mxu0 0.0
    %141 = vmatpush1.msra.mxu0 0.0
    %142 = vmatprep.subr.mxu0 0.0
    %143 = vmatpush1.msra.mxu0 0.0
    %144 = vmatprep.subr.mxu0 0.0
    %145 = vmatpush1.msra.mxu0 0.0
    %146 = vmatprep.subr.mxu0 0.0
    %147 = vmatpush1.msra.mxu0 0.0
    %148 = vmatprep.mubr.f32.mxu0 0.0
    %149 = vmatmul.mubr.f32.gmra.mrb[0].mxu0 %v67
    %v150 = vpop.f32.mrb[0].mxu0
    %v151 = vadd.f32 0.0, %v150
    %v152 = vpop.f32.mrb[0].mxu0
    %153 = vdwg.mxu0
    %154 = vmatprep.subr.mxu0 0.0
    %155 = vmatpush1.msra.mxu0 %v45
    %156 = vmatprep.subr.mxu0 0.0
    %157 = vmatpush1.msra.mxu0 %v46
    %158 = vmatprep.subr.mxu0 0.0
    %159 = vmatpush1.msra.mxu0 %v47
    %160 = vmatprep.subr.mxu0 0.0
    %161 = vmatpush1.msra.mxu0 %v48
    %162 = vmatprep.subr.mxu0 0.0
    %163 = vmatpush1.msra.mxu0 %v49
    %164 = vmatprep.subr.mxu0 0.0
    %165 = vmatpush1.msra.mxu0 %v50
    %166 = vmatprep.subr.mxu0 0.0
    %167 = vmatpush1.msra.mxu0 %v51
    %168 = vmatprep.subr.mxu0 0.0
    %169 = vmatpush1.msra.mxu0 %v52
    %170 = vmatprep.subr.mxu0 0.0
    %171 = vmatpush1.msra.mxu0 %v53
    %172 = vmatprep.subr.mxu0 0.0
    %173 = vmatpush1.msra.mxu0 %v54
    %174 = vmatprep.subr.mxu0 0.0
    %175 = vmatpush1.msra.mxu0 %v55
    %176 = vmatprep.subr.mxu0 0.0
    %177 = vmatpush1.msra.mxu0 %v56
    %178 = vmatprep.subr.mxu0 0.0
    %179 = vmatpush1.msra.mxu0 %v57
    %180 = vmatprep.subr.mxu0 0.0
    %181 = vmatpush1.msra.mxu0 %v58
    %182 = vmatprep.subr.mxu0 0.0
    %183 = vmatpush1.msra.mxu0 %v59
    %184 = vmatprep.subr.mxu0 0.0
    %185 = vmatpush1.msra.mxu0 %v60
    %186 = vmatprep.subr.mxu0 0.0
    %187 = vmatpush1.msra.mxu0 0.0
    %188 = vmatprep.subr.mxu0 0.0
    %189 = vmatpush1.msra.mxu0 0.0
    %190 = vmatprep.subr.mxu0 0.0
    %191 = vmatpush1.msra.mxu0 0.0
    %192 = vmatprep.subr.mxu0 0.0
    %193 = vmatpush1.msra.mxu0 0.0
    %194 = vmatprep.subr.mxu0 0.0
    %195 = vmatpush1.msra.mxu0 0.0
    %196 = vmatprep.subr.mxu0 0.0
    %197 = vmatpush1.msra.mxu0 0.0
    %198 = vmatprep.subr.mxu0 0.0
    %199 = vmatpush1.msra.mxu0 0.0
    %200 = vmatprep.subr.mxu0 0.0
    %201 = vmatpush1.msra.mxu0 0.0
    %202 = vmatprep.subr.mxu0 0.0
    %203 = vmatpush1.msra.mxu0 0.0
    %204 = vmatprep.subr.mxu0 0.0
    %205 = vmatpush1.msra.mxu0 0.0
    %206 = vmatprep.subr.mxu0 0.0
    %207 = vmatpush1.msra.mxu0 0.0
    %208 = vmatprep.subr.mxu0 0.0
    %209 = vmatpush1.msra.mxu0 0.0
    %210 = vmatprep.subr.mxu0 0.0
    %211 = vmatpush1.msra.mxu0 0.0
    %212 = vmatprep.subr.mxu0 0.0
    %213 = vmatpush1.msra.mxu0 0.0
    %214 = vmatprep.subr.mxu0 0.0
    %215 = vmatpush1.msra.mxu0 0.0
    %216 = vmatprep.subr.mxu0 0.0
    %217 = vmatpush1.msra.mxu0 0.0
    %218 = vmatprep.mubr.f32.mxu0 0.0
    %219 = vmatmul.mubr.f32.gmra.mrb[0].mxu0 %v44
    %v220 = vpop.f32.mrb[0].mxu0
    %v221 = vadd.f32 %v151, %v220
    %v222 = vpop.f32.mrb[0].mxu0
    %223 = vdwg.mxu0
    %224 = vst [vmem:[#allocation5] sm:$0xff] %v221
    // Predicated region
    $region14: #{tpu_custom_call.1} parent=1 // pred_check
      _
    $region15: #{tpu_custom_call.1} parent=1 // pred_check_branch
      %226 = sbr.rel (0) target = $region17
    $region16: #{tpu_custom_call.1} parent=1 // pred_region
      %s228 = ssub.s32 128, 128
      %229 = vsyncadd [#allocation4], %s228
      %s231 = sshll.u32 [#allocation5], 4
      %s232 = int_to_ptr.vmem [resolvable:$true] %s231
      %234 = dma.vmem_to_hbm [thread:$0]  %s232, 128, %s2, [#allocation4]
    $region17: #{tpu_custom_call.1} parent=1 // pred_fallthru
      _
    // Predicated region
    $region18: #{tpu_custom_call.1} parent=1 // pred_check
      _
    $region19: #{tpu_custom_call.1} parent=1 // pred_check_branch
      %236 = sbr.rel (0) target = $region21
    $region20: #{tpu_custom_call.1} parent=1 // pred_region
      %237 = dma.done [#allocation4], 128
    $region21: #{tpu_custom_call.1} parent=1 // pred_fallthru
      _
    %238 = vsyncpa [#allocation3], 1
    %239 = vsyncpa [#allocation4], 1

</llo_original>
